<compile_context>
chip_gen: v7x
topology: tpu7x:2x2x1
jax: 0.10.0
libtpu: 0.0.40
codegen_flags: <defaults>
</compile_context>

<pallas_src>
import functools

import jax
import jax.numpy as jnp
from jax import lax
from jax.experimental import pallas as pl
from jax.experimental.pallas import tpu as pltpu


# Large negative finite value instead of -inf: avoids any inf-inf NaN risk while
# still underflowing to exactly 0 under exp() after the running-max subtraction.
MASK_VALUE = -0.7 * float(jnp.finfo(jnp.float32).max)


def head_kernel(x_q_ref, x_kv_ref, wq_ref, wkv_ref, o_ref,
                q_s, m_s, l_s, acc_s, *, scale, tq, tk, head_size):
    qi = pl.program_id(1)
    ki = pl.program_id(2)
    nk = pl.num_programs(2)

    q_start = qi * tq
    kv_start = ki * tk

    @pl.when(ki == 0)
    def _init():
        # Q projection once per (b, q-tile); fold the softmax scale into q so the
        # (tq, tk) score matrix never needs an extra elementwise multiply.
        q = jnp.dot(x_q_ref[0], wq_ref[...],
                    preferred_element_type=jnp.float32)          # (tq, H) f32
        q_s[...] = q * scale
        m_s[...] = jnp.full((tq, 1), -jnp.inf, dtype=jnp.float32)
        l_s[...] = jnp.zeros((tq, 1), dtype=jnp.float32)
        acc_s[...] = jnp.zeros((tq, head_size), dtype=jnp.float32)

    # Skip kv tiles that are entirely above the causal diagonal.
    @pl.when(kv_start <= q_start + tq - 1)
    def _compute():
        # Fused K/V projection: one (tk, C) @ (C, 2H) matmul, then slice.
        kv = jnp.dot(x_kv_ref[0], wkv_ref[...],
                     preferred_element_type=jnp.float32)          # (tk, 2H) f32
        k = kv[:, :head_size].astype(jnp.bfloat16)
        v = kv[:, head_size:].astype(jnp.bfloat16)

        q = q_s[...].astype(jnp.bfloat16)                         # (tq, H), pre-scaled

        # Scores: contract on the last dims (no explicit k transpose).
        s = lax.dot_general(q, k,
                            dimension_numbers=(((1,), (1,)), ((), ())),
                            preferred_element_type=jnp.float32)   # (tq, tk) f32

        # Causal mask with global row/col offsets (computed once per tile pair).
        row = q_start + lax.broadcasted_iota(jnp.int32, (tq, tk), 0)
        col = kv_start + lax.broadcasted_iota(jnp.int32, (tq, tk), 1)
        s = jnp.where(col <= row, s, MASK_VALUE)

        # Online softmax update (f32).
        m_prev = m_s[...]
        m_new = jnp.maximum(m_prev, jnp.max(s, axis=-1, keepdims=True))
        alpha = jnp.exp(m_prev - m_new)
        p = jnp.exp(s - m_new)
        l_s[...] = alpha * l_s[...] + jnp.sum(p, axis=-1, keepdims=True)
        acc_s[...] = alpha * acc_s[...] + jnp.dot(
            p.astype(jnp.bfloat16), v, preferred_element_type=jnp.float32)
        m_s[...] = m_new

    @pl.when(ki == nk - 1)
    def _finalize():
        inv_l = pl.reciprocal(l_s[...], approx=True)
        o_ref[0] = (acc_s[...] * inv_l).astype(o_ref.dtype)


def head_forward(x, wk, wq, wv, *, block_q=128, block_k=128):
    """x: (B, T, C); wk/wq/wv: (C, H) = PyTorch nn.Linear weight transposed."""
    B, T, C = x.shape
    H = wk.shape[1]
    scale = float(C) ** -0.5

    tq = min(block_q, T)
    tk = min(block_k, T)
    if T % tq or T % tk:
        raise ValueError(f"T={T} must be divisible by tile sizes ({tq}, {tk})")

    # bf16 MXU inputs (f32 accumulation happens inside the kernel).
    x_b = x.astype(jnp.bfloat16)
    wq_b = wq.astype(jnp.bfloat16)
    wkv_b = jnp.concatenate([wk, wv], axis=1).astype(jnp.bfloat16)  # (C, 2H)

    kernel = functools.partial(head_kernel, scale=scale, tq=tq, tk=tk, head_size=H)

    return pl.pallas_call(
        kernel,
        out_shape=jax.ShapeDtypeStruct((B, T, H), x.dtype),
        grid_spec=pltpu.PrefetchScalarGridSpec(
            num_scalar_prefetch=0,
            grid=(B, T // tq, T // tk),
            in_specs=[
                # q-tile view of x (constant across ki -> fetched once per q tile)
                pl.BlockSpec((1, tq, C), lambda b, qi, ki: (b, qi, 0)),
                # kv-tile view of x
                pl.BlockSpec((1, tk, C), lambda b, qi, ki: (b, ki, 0)),
                # weights, resident across the whole grid
                pl.BlockSpec((C, H), lambda b, qi, ki: (0, 0)),
                pl.BlockSpec((C, 2 * H), lambda b, qi, ki: (0, 0)),
            ],
            out_specs=pl.BlockSpec((1, tq, H), lambda b, qi, ki: (b, qi, 0)),
            scratch_shapes=[
                pltpu.VMEM((tq, H), jnp.float32),   # cached scaled q
                pltpu.VMEM((tq, 1), jnp.float32),   # running max m
                pltpu.VMEM((tq, 1), jnp.float32),   # running denom l
                pltpu.VMEM((tq, H), jnp.float32),   # output accumulator
            ],
        ),
        compiler_params=pltpu.CompilerParams(
            dimension_semantics=("parallel", "parallel", "arbitrary"),
            vmem_limit_bytes=32 * 1024 * 1024,
        ),
    )(x_b, x_b, wq_b, wkv_b)


def reference_forward(x, wk, wq, wv):
    """Pure-JAX f32 reference matching the PyTorch module semantics (eval mode)."""
    B, T, C = x.shape
    k = x @ wk
    q = x @ wq
    v = x @ wv
    wei = (q @ jnp.swapaxes(k, -2, -1)) * (float(C) ** -0.5)
    mask = jnp.tril(jnp.ones((T, T), dtype=bool))
    wei = jnp.where(mask, wei, -jnp.inf)
    wei = jax.nn.softmax(wei, axis=-1)
    return wei @ v


def _run_case(B, T, C, H, seed=0):
    key = jax.random.PRNGKey(seed)
    kx, kk, kq, kv = jax.random.split(key, 4)

    x = jax.random.normal(kx, (B, T, C), dtype=jnp.float32)
    # nn.Linear(n_embd, head_size, bias=False) weight is (H, C); stored pre-transposed.
    wk = jax.random.normal(kk, (C, H), dtype=jnp.float32) * (C ** -0.5)
    wq = jax.random.normal(kq, (C, H), dtype=jnp.float32) * (C ** -0.5)
    wv = jax.random.normal(kv, (C, H), dtype=jnp.float32) * (C ** -0.5)

    out = jax.block_until_ready(head_forward(x, wk, wq, wv))
    ref = jax.block_until_ready(reference_forward(x, wk, wq, wv))

    assert out.shape == (B, T, H), out.shape
    # Loosened tolerance: kernel uses bf16 MXU inputs + approx reciprocal.
    err = float(jnp.max(jnp.abs(out - ref)))
    assert jnp.allclose(out, ref, atol=5e-2, rtol=5e-2), err


if __name__ == "__main__":
    # Toy shapes consistent with the module: batch=2, block_size=8, n_embd=32,
    # head_size=16 (single tile, single-step softmax).
    _run_case(2, 8, 32, 16, seed=0)
    # Multi-tile path: exercises online softmax, causal kv-tile skipping and the
    # (parallel, parallel, arbitrary) grid.
    _run_case(2, 256, 32, 16, seed=1)
    print("KERNEL_OK")
</pallas_src>

<mosaic_0001>
module attributes {stable_mosaic.version = 11 : i64} {
  func.func @head_kernel(%arg0: i32, %arg1: i32, %arg2: i32, %arg3: memref<1x8x32xbf16, #tpu.memory_space<vmem>>, %arg4: memref<1x8x32xbf16, #tpu.memory_space<vmem>>, %arg5: memref<32x16xbf16, #tpu.memory_space<vmem>>, %arg6: memref<32x32xbf16, #tpu.memory_space<vmem>>, %arg7: memref<1x8x16xf32, #tpu.memory_space<vmem>>, %arg8: memref<8x16xf32, #tpu.memory_space<vmem>>, %arg9: memref<8x1xf32, #tpu.memory_space<vmem>>, %arg10: memref<8x1xf32, #tpu.memory_space<vmem>>, %arg11: memref<8x16xf32, #tpu.memory_space<vmem>>) attributes {dimension_semantics = [#tpu.dimension_semantics<parallel>, #tpu.dimension_semantics<parallel>, #tpu.dimension_semantics<arbitrary>], iteration_bounds = array<i64: 2, 1, 1>, scalar_prefetch = 0 : i64, scratch_operands = 4 : i64, tpu.core_type = #tpu.core_type<tc>, window_params = [{transform_indices = @transform_0, window_bounds = array<i64: 1, 8, 32>}, {transform_indices = @transform_1, window_bounds = array<i64: 1, 8, 32>}, {pipeline_mode = #tpu.pipeline_mode<synchronous>, transform_indices = @transform_2, window_bounds = array<i64: 32, 16>}, {pipeline_mode = #tpu.pipeline_mode<synchronous>, transform_indices = @transform_3, window_bounds = array<i64: 32, 32>}, {transform_indices = @transform_4, window_bounds = array<i64: 1, 8, 16>}]} {
    %c8_i32 = arith.constant 8 : i32
    %0 = arith.muli %arg1, %c8_i32 : i32
    %c8_i32_0 = arith.constant 8 : i32
    %1 = arith.muli %arg2, %c8_i32_0 : i32
    %c0_i32 = arith.constant 0 : i32
    %2 = arith.cmpi eq, %arg2, %c0_i32 : i32
    %3 = arith.extui %2 : i1 to i32
    %c0_i32_1 = arith.constant 0 : i32
    %4 = arith.cmpi ne, %3, %c0_i32_1 : i32
    scf.if %4 {
      %c0 = arith.constant 0 : index
      %c0_6 = arith.constant 0 : index
      %c0_7 = arith.constant 0 : index
      %13 = vector.load %arg3[%c0, %c0_6, %c0_7] : memref<1x8x32xbf16, #tpu.memory_space<vmem>>, vector<1x8x32xbf16>
      %14 = vector.shape_cast %13 : vector<1x8x32xbf16> to vector<8x32xbf16>
      %c0_8 = arith.constant 0 : index
      %c0_9 = arith.constant 0 : index
      %15 = vector.load %arg5[%c0_8, %c0_9] : memref<32x16xbf16, #tpu.memory_space<vmem>>, vector<32x16xbf16>
      %cst = arith.constant dense<0.000000e+00> : vector<8x16xf32>
      %16 = tpu.matmul %14, %15, %cst {dimension_numbers = #tpu.dot_dimension_numbers<[1], [0], [0], [1], [0, 0, 1, 1], [], []>} : vector<8x32xbf16>, vector<32x16xbf16>, vector<8x16xf32> -> vector<8x16xf32>
      %cst_10 = arith.constant 0.176776692 : f32
      %17 = vector.broadcast %cst_10 : f32 to vector<8x16xf32>
      %18 = arith.mulf %16, %17 : vector<8x16xf32>
      %c0_11 = arith.constant 0 : index
      %c0_12 = arith.constant 0 : index
      %19 = vector.load %arg8[%c0_11, %c0_12] : memref<8x16xf32, #tpu.memory_space<vmem>>, vector<8x16xf32>
      tpu.vector_store %arg8[%c0_11, %c0_12], %18 {strides = array<i32>} : memref<8x16xf32, #tpu.memory_space<vmem>>, vector<8x16xf32>,
      %cst_13 = arith.constant 0xFF800000 : f32
      %20 = vector.broadcast %cst_13 : f32 to vector<8x1xf32>
      %c0_14 = arith.constant 0 : index
      %c0_15 = arith.constant 0 : index
      %21 = vector.load %arg9[%c0_14, %c0_15] : memref<8x1xf32, #tpu.memory_space<vmem>>, vector<8x1xf32>
      tpu.vector_store %arg9[%c0_14, %c0_15], %20 {strides = array<i32>} : memref<8x1xf32, #tpu.memory_space<vmem>>, vector<8x1xf32>,
      %cst_16 = arith.constant 0.000000e+00 : f32
      %22 = vector.broadcast %cst_16 : f32 to vector<8x1xf32>
      %c0_17 = arith.constant 0 : index
      %c0_18 = arith.constant 0 : index
      %23 = vector.load %arg10[%c0_17, %c0_18] : memref<8x1xf32, #tpu.memory_space<vmem>>, vector<8x1xf32>
      tpu.vector_store %arg10[%c0_17, %c0_18], %22 {strides = array<i32>} : memref<8x1xf32, #tpu.memory_space<vmem>>, vector<8x1xf32>,
      %cst_19 = arith.constant 0.000000e+00 : f32
      %24 = vector.broadcast %cst_19 : f32 to vector<8x16xf32>
      %c0_20 = arith.constant 0 : index
      %c0_21 = arith.constant 0 : index
      %25 = vector.load %arg11[%c0_20, %c0_21] : memref<8x16xf32, #tpu.memory_space<vmem>>, vector<8x16xf32>
      tpu.vector_store %arg11[%c0_20, %c0_21], %24 {strides = array<i32>} : memref<8x16xf32, #tpu.memory_space<vmem>>, vector<8x16xf32>,
    } else {
    }
    %c8_i32_2 = arith.constant 8 : i32
    %5 = arith.addi %0, %c8_i32_2 : i32
    %c1_i32 = arith.constant 1 : i32
    %6 = arith.subi %5, %c1_i32 : i32
    %7 = arith.cmpi sle, %1, %6 : i32
    %8 = arith.extui %7 : i1 to i32
    %c0_i32_3 = arith.constant 0 : i32
    %9 = arith.cmpi ne, %8, %c0_i32_3 : i32
    scf.if %9 {
      %c0 = arith.constant 0 : index
      %c0_6 = arith.constant 0 : index
      %c0_7 = arith.constant 0 : index
      %13 = vector.load %arg4[%c0, %c0_6, %c0_7] : memref<1x8x32xbf16, #tpu.memory_space<vmem>>, vector<1x8x32xbf16>
      %14 = vector.shape_cast %13 : vector<1x8x32xbf16> to vector<8x32xbf16>
      %c0_8 = arith.constant 0 : index
      %c0_9 = arith.constant 0 : index
      %15 = vector.load %arg6[%c0_8, %c0_9] : memref<32x32xbf16, #tpu.memory_space<vmem>>, vector<32x32xbf16>
      %cst = arith.constant dense<0.000000e+00> : vector<8x32xf32>
      %16 = tpu.matmul %14, %15, %cst {dimension_numbers = #tpu.dot_dimension_numbers<[1], [0], [0], [1], [0, 0, 1, 1], [], []>} : vector<8x32xbf16>, vector<32x32xbf16>, vector<8x32xf32> -> vector<8x32xf32>
      %17 = vector.extract_strided_slice %16 {offsets = [0, 0], sizes = [8, 16], strides = [1, 1]} : vector<8x32xf32> to vector<8x16xf32>
      %18 = arith.truncf %17 : vector<8x16xf32> to vector<8x16xbf16>
      %19 = vector.extract_strided_slice %16 {offsets = [0, 16], sizes = [8, 16], strides = [1, 1]} : vector<8x32xf32> to vector<8x16xf32>
      %20 = arith.truncf %19 : vector<8x16xf32> to vector<8x16xbf16>
      %c0_10 = arith.constant 0 : index
      %c0_11 = arith.constant 0 : index
      %21 = vector.load %arg8[%c0_10, %c0_11] : memref<8x16xf32, #tpu.memory_space<vmem>>, vector<8x16xf32>
      %22 = arith.truncf %21 : vector<8x16xf32> to vector<8x16xbf16>
      %cst_12 = arith.constant dense<0.000000e+00> : vector<8x8xf32>
      %23 = tpu.matmul %22, %18, %cst_12 {dimension_numbers = #tpu.dot_dimension_numbers<[1], [1], [0], [0], [0, 0, 1, 0], [], []>} : vector<8x16xbf16>, vector<8x16xbf16>, vector<8x8xf32> -> vector<8x8xf32>
      %24 = tpu.iota {dimensions = array<i32: 0>} : vector<8x8xi32>
      %25 = vector.broadcast %0 : i32 to vector<8x8xi32>
      %26 = arith.addi %25, %24 : vector<8x8xi32>
      %27 = tpu.iota {dimensions = array<i32: 1>} : vector<8x8xi32>
      %28 = vector.broadcast %1 : i32 to vector<8x8xi32>
      %29 = arith.addi %28, %27 : vector<8x8xi32>
      %30 = arith.cmpi sle, %29, %26 : vector<8x8xi32>
      %cst_13 = arith.constant -2.38197633E+38 : f32
      %31 = vector.broadcast %cst_13 : f32 to vector<8x8xf32>
      %32 = arith.select %30, %23, %31 : vector<8x8xi1>, vector<8x8xf32>
      %c0_14 = arith.constant 0 : index
      %c0_15 = arith.constant 0 : index
      %33 = vector.load %arg9[%c0_14, %c0_15] : memref<8x1xf32, #tpu.memory_space<vmem>>, vector<8x1xf32>
      %cst_16 = arith.constant dense<0xFF800000> : vector<8xf32>
      %34 = vector.multi_reduction <maximumf>, %32, %cst_16 [1] : vector<8x8xf32> to vector<8xf32>
      %35 = vector.shape_cast %34 : vector<8xf32> to vector<8x1xf32>
      %36 = arith.maximumf %33, %35 : vector<8x1xf32>
      %37 = arith.subf %33, %36 : vector<8x1xf32>
      %38 = math.exp %37 : vector<8x1xf32>
      %39 = vector.broadcast %36 : vector<8x1xf32> to vector<8x8xf32>
      %40 = arith.subf %32, %39 : vector<8x8xf32>
      %41 = math.exp %40 : vector<8x8xf32>
      %c0_17 = arith.constant 0 : index
      %c0_18 = arith.constant 0 : index
      %42 = vector.load %arg10[%c0_17, %c0_18] : memref<8x1xf32, #tpu.memory_space<vmem>>, vector<8x1xf32>
      %43 = arith.mulf %38, %42 : vector<8x1xf32>
      %cst_19 = arith.constant dense<0.000000e+00> : vector<8xf32>
      %44 = vector.multi_reduction <add>, %41, %cst_19 [1] : vector<8x8xf32> to vector<8xf32>
      %45 = vector.shape_cast %44 : vector<8xf32> to vector<8x1xf32>
      %46 = arith.addf %43, %45 : vector<8x1xf32>
      %c0_20 = arith.constant 0 : index
      %c0_21 = arith.constant 0 : index
      %47 = vector.load %arg10[%c0_20, %c0_21] : memref<8x1xf32, #tpu.memory_space<vmem>>, vector<8x1xf32>
      tpu.vector_store %arg10[%c0_20, %c0_21], %46 {strides = array<i32>} : memref<8x1xf32, #tpu.memory_space<vmem>>, vector<8x1xf32>,
      %c0_22 = arith.constant 0 : index
      %c0_23 = arith.constant 0 : index
      %48 = vector.load %arg11[%c0_22, %c0_23] : memref<8x16xf32, #tpu.memory_space<vmem>>, vector<8x16xf32>
      %49 = vector.broadcast %38 : vector<8x1xf32> to vector<8x16xf32>
      %50 = arith.mulf %49, %48 : vector<8x16xf32>
      %51 = arith.truncf %41 : vector<8x8xf32> to vector<8x8xbf16>
      %cst_24 = arith.constant dense<0.000000e+00> : vector<8x16xf32>
      %52 = tpu.matmul %51, %20, %cst_24 {dimension_numbers = #tpu.dot_dimension_numbers<[1], [0], [0], [1], [0, 0, 1, 1], [], []>} : vector<8x8xbf16>, vector<8x16xbf16>, vector<8x16xf32> -> vector<8x16xf32>
      %53 = arith.addf %50, %52 : vector<8x16xf32>
      %c0_25 = arith.constant 0 : index
      %c0_26 = arith.constant 0 : index
      %54 = vector.load %arg11[%c0_25, %c0_26] : memref<8x16xf32, #tpu.memory_space<vmem>>, vector<8x16xf32>
      tpu.vector_store %arg11[%c0_25, %c0_26], %53 {strides = array<i32>} : memref<8x16xf32, #tpu.memory_space<vmem>>, vector<8x16xf32>,
      %c0_27 = arith.constant 0 : index
      %c0_28 = arith.constant 0 : index
      %55 = vector.load %arg9[%c0_27, %c0_28] : memref<8x1xf32, #tpu.memory_space<vmem>>, vector<8x1xf32>
      tpu.vector_store %arg9[%c0_27, %c0_28], %36 {strides = array<i32>} : memref<8x1xf32, #tpu.memory_space<vmem>>, vector<8x1xf32>,
    } else {
    }
    %c0_i32_4 = arith.constant 0 : i32
    %10 = arith.cmpi eq, %arg2, %c0_i32_4 : i32
    %11 = arith.extui %10 : i1 to i32
    %c0_i32_5 = arith.constant 0 : i32
    %12 = arith.cmpi ne, %11, %c0_i32_5 : i32
    scf.if %12 {
      %c0 = arith.constant 0 : index
      %c0_6 = arith.constant 0 : index
      %13 = vector.load %arg10[%c0, %c0_6] : memref<8x1xf32, #tpu.memory_space<vmem>>, vector<8x1xf32>
      %14 = tpu.reciprocal %13 {approx = true} : vector<8x1xf32> -> vector<8x1xf32>
      %c0_7 = arith.constant 0 : index
      %c0_8 = arith.constant 0 : index
      %15 = vector.load %arg11[%c0_7, %c0_8] : memref<8x16xf32, #tpu.memory_space<vmem>>, vector<8x16xf32>
      %16 = vector.broadcast %14 : vector<8x1xf32> to vector<8x16xf32>
      %17 = arith.mulf %15, %16 : vector<8x16xf32>
      %c0_9 = arith.constant 0 : index
      %c0_10 = arith.constant 0 : index
      %c0_11 = arith.constant 0 : index
      %18 = vector.load %arg7[%c0_9, %c0_10, %c0_11] : memref<1x8x16xf32, #tpu.memory_space<vmem>>, vector<1x8x16xf32>
      %19 = vector.shape_cast %18 : vector<1x8x16xf32> to vector<8x16xf32>
      %20 = vector.shape_cast %17 : vector<8x16xf32> to vector<1x8x16xf32>
      tpu.vector_store %arg7[%c0_9, %c0_10, %c0_11], %20 {strides = array<i32>} : memref<1x8x16xf32, #tpu.memory_space<vmem>>, vector<1x8x16xf32>,
    } else {
    }
    return
  }
  func.func @transform_0(%arg0: i32, %arg1: i32, %arg2: i32) -> (i32, i32, i32) {
    %c0_i32 = arith.constant 0 : i32
    %c0_i32_0 = arith.constant 0 : i32
    return %arg0, %arg1, %c0_i32 : i32, i32, i32
  }
  func.func @transform_1(%arg0: i32, %arg1: i32, %arg2: i32) -> (i32, i32, i32) {
    %c0_i32 = arith.constant 0 : i32
    %c0_i32_0 = arith.constant 0 : i32
    return %arg0, %arg2, %c0_i32 : i32, i32, i32
  }
  func.func @transform_2(%arg0: i32, %arg1: i32, %arg2: i32) -> (i32, i32) {
    %c0_i32 = arith.constant 0 : i32
    %c0_i32_0 = arith.constant 0 : i32
    %c0_i32_1 = arith.constant 0 : i32
    return %c0_i32, %c0_i32_0 : i32, i32
  }
  func.func @transform_3(%arg0: i32, %arg1: i32, %arg2: i32) -> (i32, i32) {
    %c0_i32 = arith.constant 0 : i32
    %c0_i32_0 = arith.constant 0 : i32
    %c0_i32_1 = arith.constant 0 : i32
    return %c0_i32, %c0_i32_0 : i32, i32
  }
  func.func @transform_4(%arg0: i32, %arg1: i32, %arg2: i32) -> (i32, i32, i32) {
    %c0_i32 = arith.constant 0 : i32
    %c0_i32_0 = arith.constant 0 : i32
    return %arg0, %arg1, %c0_i32 : i32, i32, i32
  }
}

</mosaic_0001>

<llo_original>
// kernel: tpu_custom_call.1
$region0: #{tpu_custom_call.1}
  #allocation0 [shape = 'u32[]', space=smem, size = 0x4, offset = 0x4, fixed_abs, tag = 'smem constant byte address 0x4 - core index']
  #allocation1 [shape = 'u32[144,128]{1,0:T(1,128)}', space=vmem, size = 0x12000, scoped, tag = 'internal scratch']
  #allocation2 [shape = 'f32[8,16]{1,0:T(8,128)}', space=vmem, size = 0x1000, scoped, tag = 'scratch operand']
  #allocation3 [shape = 'f32[8,1]{1,0:T(8,128)}', space=vmem, size = 0x1000, scoped, tag = 'scratch operand']
  #allocation4 [shape = 'f32[8,1]{1,0:T(8,128)}', space=vmem, size = 0x1000, scoped, tag = 'scratch operand']
  #allocation5 [shape = 'f32[8,16]{1,0:T(8,128)}', space=vmem, size = 0x1000, scoped, tag = 'scratch operand']
  %s0 = inlined_call_operand.vmem [shape: bf16[2,8,32], index: 0, kind: input, shape index: {}]
  %s1 = inlined_call_operand.hbm [shape: bf16[2,8,32], index: 1, kind: input, shape index: {}]
  %s2 = inlined_call_operand.vmem [shape: bf16[32,16], index: 2, kind: input, shape index: {}]
  %s3 = inlined_call_operand.vmem [shape: bf16[32,32], index: 3, kind: input, shape index: {}]
  %s4 = inlined_call_operand.hbm [shape: f32[2,8,16], index: 4, kind: output, shape index: {}]
  %s5 = sld [smem:[#allocation0]]
  $region65: #{tpu_custom_call.1} parent=0
    _
  %s7 = ssub.s32 1, %s5
  %s8 = scalar_select 0, %s7, %s5
  $region1: #{tpu_custom_call.1} parent=0
    #allocation6 [shape = 'u8[4096]{0}', space=vmem, size = 0x1000, scoped, tag = 'input window, operand 1']
    #allocation7 [shape = 's32[2]{0}', space=sflag, size = 0x8, scoped, tag = 'scoped memory for tpu_custom_call.1']
    #allocation8 [shape = 's32[2]{0}', space=sflag, size = 0x8, scoped, tag = 'scoped memory for tpu_custom_call.1']
    #allocation9 [shape = 'u8[8192]{0}', space=vmem, size = 0x2000, scoped, tag = 'output window, operand 0']
    %9 = vsyncpa [#allocation7], 0
    %s10 = scalar_lea.sflag [#allocation7], 1
    %11 = vsyncpa %s10, 0
    %12 = vsyncpa [#allocation8], 0
    %s13 = scalar_lea.sflag [#allocation8], 1
    %14 = vsyncpa %s13, 0
    loop: start=0, step=1, limit=4
    $region2: #{tpu_custom_call.1} parent=1 // loop_pre_header
      _
    $region3: #{tpu_custom_call.1} parent=1 // loop_header
      %s16 = sphi 0, %s20
      %p17 = scmp.ge.s32.totalorder %s16, 4
      %s23 = sphi 0, %s42
      %s24 = sphi 0, %s38
      %s25 = sphi 0, %s34
      %s26 = sphi 0, %s23
      %s27 = sphi 0, %s24
      %s28 = sphi 0, %s25
      %s29 = sphi 0, %s26
      %s30 = sphi 0, %s27
      %s31 = sphi 0, %s28
      %s47 = sphi 0, %s49
      %s50 = sphi 0, %s47
      %s51 = sphi 0, %s50
      %s67 = sphi 0, %s51
      %s75 = sphi 0, %s77
      %s78 = sphi 0, %s75
      %s79 = sphi 0, %s78
      %s95 = sphi 0, %s79
      %s99 = sphi 0, %s99
      %s101 = sphi 0, %s99
      %s102 = sphi 0, %s101
      %s116 = sphi 0, %s102
      %s120 = sphi 0, %s120
      %s122 = sphi 0, %s120
      %s123 = sphi 0, %s122
      %s137 = sphi 0, %s123
      %s145 = sphi 0, %s147
      %s148 = sphi 0, %s145
      %s149 = sphi 0, %s148
      %s165 = sphi 0, %s149
    $region4: #{tpu_custom_call.1} parent=1 // loop_header_branch
      %19 = sbr.rel (%p17) target = $region8
    $region5: #{tpu_custom_call.1} parent=1 // loop_body
      %s21 = ssub.s32 %s16, 1
      %s22 = ssub.s32 %s16, 2
      %s32 = sadd.s32 1, %s25
      %p33 = scmp.ge.s32.totalorder %s32, 1
      %s34 = scalar_select %p33, 0, %s32
      %s35 = sadd.s32 1, %s24
      %s36 = scalar_select %p33, %s35, %s24
      %p37 = scmp.ge.s32.totalorder %s36, 1
      %s38 = scalar_select %p37, 0, %s36
      %s39 = sadd.s32 1, %s23
      %s40 = scalar_select %p37, %s39, %s23
      %p41 = scmp.ge.s32.totalorder %s40, 2
      %s42 = scalar_select %p41, 0, %s40
      %s43 = ssub.s32 %s23, %s42
      %s44 = ssub.s32 %s24, %s38
      %s45 = sor.u32 %s43, %s44
      %p46 = scmp.eq.s32.totalorder %s45, 0
      %s48 = sadd.s32 %s47, 1
      %s49 = scalar_select %p46, %s47, %s48
      %p52 = pneg %p46
      %p53 = scmp.eq.s32.totalorder %s16, 1
      %p54 = por %p52, %p53
      %p55 = scmp.ne.s32.totalorder %s47, %s50
      %p56 = scmp.eq.s32.totalorder %s16, 0
      %p57 = por %p55, %p56
      %p58 = scmp.ne.s32.totalorder %s47, %s50
      %p59 = scmp.eq.s32.totalorder %s21, 1
      %p60 = por %p58, %p59
      %p61 = scmp.ne.s32.totalorder %s50, %s51
      %p62 = scmp.eq.s32.totalorder %s21, 0
      %p63 = por %p61, %p62
      %p64 = scmp.ne.s32.totalorder %s50, %s51
      %p65 = scmp.eq.s32.totalorder %s22, 1
      %p66 = por %p64, %p65
      %p68 = scmp.ne.s32.totalorder %s51, %s67
      %p69 = scmp.eq.s32.totalorder %s22, 0
      %p70 = por %p68, %p69
      %s71 = ssub.s32 %s23, %s42
      %s72 = ssub.s32 %s25, %s34
      %s73 = sor.u32 %s71, %s72
      %p74 = scmp.eq.s32.totalorder %s73, 0
      %s76 = sadd.s32 %s75, 1
      %s77 = scalar_select %p74, %s75, %s76
      %p80 = pneg %p74
      %p81 = scmp.eq.s32.totalorder %s16, 1
      %p82 = por %p80, %p81
      %p83 = scmp.ne.s32.totalorder %s75, %s78
      %p84 = scmp.eq.s32.totalorder %s16, 0
      %p85 = por %p83, %p84
      %p86 = scmp.ne.s32.totalorder %s75, %s78
      %p87 = scmp.eq.s32.totalorder %s21, 1
      %p88 = por %p86, %p87
      %p89 = scmp.ne.s32.totalorder %s78, %s79
      %p90 = scmp.eq.s32.totalorder %s21, 0
      %p91 = por %p89, %p90
      %p92 = scmp.ne.s32.totalorder %s78, %s79
      %p93 = scmp.eq.s32.totalorder %s22, 1
      %p94 = por %p92, %p93
      %p96 = scmp.ne.s32.totalorder %s79, %s95
      %p97 = scmp.eq.s32.totalorder %s22, 0
      %p98 = por %p96, %p97
      %s100 = sadd.s32 %s99, 1
      %p103 = scmp.eq.s32.totalorder %s16, 1
      %p104 = scmp.ne.s32.totalorder %s99, %s101
      %p105 = scmp.eq.s32.totalorder %s16, 0
      %p106 = por %p104, %p105
      %p107 = scmp.ne.s32.totalorder %s99, %s101
      %p108 = scmp.eq.s32.totalorder %s21, 1
      %p109 = por %p107, %p108
      %p110 = scmp.ne.s32.totalorder %s101, %s102
      %p111 = scmp.eq.s32.totalorder %s21, 0
      %p112 = por %p110, %p111
      %p113 = scmp.ne.s32.totalorder %s101, %s102
      %p114 = scmp.eq.s32.totalorder %s22, 1
      %p115 = por %p113, %p114
      %p117 = scmp.ne.s32.totalorder %s102, %s116
      %p118 = scmp.eq.s32.totalorder %s22, 0
      %p119 = por %p117, %p118
      %s121 = sadd.s32 %s120, 1
      %p124 = scmp.eq.s32.totalorder %s16, 1
      %p125 = scmp.ne.s32.totalorder %s120, %s122
      %p126 = scmp.eq.s32.totalorder %s16, 0
      %p127 = por %p125, %p126
      %p128 = scmp.ne.s32.totalorder %s120, %s122
      %p129 = scmp.eq.s32.totalorder %s21, 1
      %p130 = por %p128, %p129
      %p131 = scmp.ne.s32.totalorder %s122, %s123
      %p132 = scmp.eq.s32.totalorder %s21, 0
      %p133 = por %p131, %p132
      %p134 = scmp.ne.s32.totalorder %s122, %s123
      %p135 = scmp.eq.s32.totalorder %s22, 1
      %p136 = por %p134, %p135
      %p138 = scmp.ne.s32.totalorder %s123, %s137
      %p139 = scmp.eq.s32.totalorder %s22, 0
      %p140 = por %p138, %p139
      %s141 = ssub.s32 %s23, %s42
      %s142 = ssub.s32 %s24, %s38
      %s143 = sor.u32 %s141, %s142
      %p144 = scmp.eq.s32.totalorder %s143, 0
      %s146 = sadd.s32 %s145, 1
      %s147 = scalar_select %p144, %s145, %s146
      %p150 = pneg %p144
      %p151 = scmp.eq.s32.totalorder %s16, 1
      %p152 = por %p150, %p151
      %p153 = scmp.ne.s32.totalorder %s145, %s148
      %p154 = scmp.eq.s32.totalorder %s16, 0
      %p155 = por %p153, %p154
      %p156 = scmp.ne.s32.totalorder %s145, %s148
      %p157 = scmp.eq.s32.totalorder %s21, 1
      %p158 = por %p156, %p157
      %p159 = scmp.ne.s32.totalorder %s148, %s149
      %p160 = scmp.eq.s32.totalorder %s21, 0
      %p161 = por %p159, %p160
      %p162 = scmp.ne.s32.totalorder %s148, %s149
      %p163 = scmp.eq.s32.totalorder %s22, 1
      %p164 = por %p162, %p163
      %p166 = scmp.ne.s32.totalorder %s149, %s165
      %p167 = scmp.eq.s32.totalorder %s22, 0
      %p168 = por %p166, %p167
      %p169 = scmp.le.s32.totalorder 1, %s16
      %p170 = scmp.lt.s32.totalorder %s16, 3
      %p171 = pnand %p169, %p170
      %p172 = pneg %p171
      // Predicated region
      $region9: #{tpu_custom_call.1} parent=5 // pred_check
        _
      $region10: #{tpu_custom_call.1} parent=5 // pred_check_branch
        %174 = sbr.rel (%p171) target = $region12
      $region11: #{tpu_custom_call.1} parent=5 // pred_region
        %s175 = ssub.s32 %s16, 1
        // Predicated region
        $region13: #{tpu_custom_call.1} parent=11 // pred_check
          %p176 = pneg %p112
        $region14: #{tpu_custom_call.1} parent=11 // pred_check_branch
          %178 = sbr.rel (%p176) target = $region16
        $region15: #{tpu_custom_call.1} parent=11 // pred_region
          _
        $region16: #{tpu_custom_call.1} parent=11 // pred_fallthru
          _
        // Predicated region
        $region17: #{tpu_custom_call.1} parent=11 // pred_check
          %p179 = pneg %p133
        $region18: #{tpu_custom_call.1} parent=11 // pred_check_branch
          %181 = sbr.rel (%p179) target = $region20
        $region19: #{tpu_custom_call.1} parent=11 // pred_region
          _
        $region20: #{tpu_custom_call.1} parent=11 // pred_fallthru
          _
      $region12: #{tpu_custom_call.1} parent=5 // pred_fallthru
        _
      %p182 = scmp.lt.s32.totalorder %s16, 2
      // Predicated region
      $region21: #{tpu_custom_call.1} parent=5 // pred_check
        %p183 = pneg %p182
      $region22: #{tpu_custom_call.1} parent=5 // pred_check_branch
        %185 = sbr.rel (%p183) target = $region24
      $region23: #{tpu_custom_call.1} parent=5 // pred_region
        // Predicated region
        $region25: #{tpu_custom_call.1} parent=23 // pred_check
          %p186 = pneg %p57
        $region26: #{tpu_custom_call.1} parent=23 // pred_check_branch
          %188 = sbr.rel (%p186) target = $region28
        $region27: #{tpu_custom_call.1} parent=23 // pred_region
          %p189 = scmp.lt.s32.totalorder %s23, 1
          %s190 = scalar_select %p189, %s23, 1
          %p191 = scmp.lt.s32.totalorder %s24, 0
          %s192 = scalar_select %p191, %s24, 0
          %s193 = sadd.s32 %s192, %s190
          %s194 = smul.addr %s193, 4
          %s195 = scalar_lea.vmem %s0, %s194
        $region28: #{tpu_custom_call.1} parent=23 // pred_fallthru
          _
        // Predicated region
        $region29: #{tpu_custom_call.1} parent=23 // pred_check
          %p196 = pneg %p85
        $region30: #{tpu_custom_call.1} parent=23 // pred_check_branch
          %198 = sbr.rel (%p196) target = $region32
        $region31: #{tpu_custom_call.1} parent=23 // pred_region
          %s199 = sand.u32 %s75, 1
          %s200 = scalar_lea.sflag [#allocation7], %s199
          %s201 = sand.u32 %s75, 1
          %s202 = smul.addr %s201, 4
          %s203 = scalar_lea.vmem [#allocation6], %s202
          %s205 = ssub.s32 64, 64
          %206 = vsyncadd %s200, %s205
          %s207 = sadd.s32 %s25, %s23
          %s208 = smul.addr %s207, 64
          %s209 = scalar_lea.hbm %s1, %s208
          %s211 = sshll.u32 %s203, 4
          %s212 = int_to_ptr.vmem [resolvable:$true] %s211
          %214 = dma.hbm_to_vmem [thread:$0]  %s209, 64, %s212, %s200
        $region32: #{tpu_custom_call.1} parent=23 // pred_fallthru
          _
      $region24: #{tpu_custom_call.1} parent=5 // pred_fallthru
        _
      %p215 = scmp.le.s32.totalorder 1, %s16
      %p216 = scmp.lt.s32.totalorder %s16, 3
      %p217 = pnand %p215, %p216
      %p218 = pneg %p217
      // Predicated region
      $region33: #{tpu_custom_call.1} parent=5 // pred_check
        _
      $region34: #{tpu_custom_call.1} parent=5 // pred_check_branch
        %220 = sbr.rel (%p217) target = $region36
      $region35: #{tpu_custom_call.1} parent=5 // pred_region
        %s221 = ssub.s32 %s16, 1
        %s222 = sand.u32 %s78, 1
        %s223 = scalar_lea.sflag [#allocation7], %s222
        %s224 = sand.u32 %s78, 1
        %s225 = smul.addr %s224, 4
        %s226 = scalar_lea.vmem [#allocation6], %s225
        // Predicated region
        $region37: #{tpu_custom_call.1} parent=35 // pred_check
          %p227 = pneg %p91
        $region38: #{tpu_custom_call.1} parent=35 // pred_check_branch
          %229 = sbr.rel (%p227) target = $region40
        $region39: #{tpu_custom_call.1} parent=35 // pred_region
          %230 = dma.done %s223, 64
        $region40: #{tpu_custom_call.1} parent=35 // pred_fallthru
          _
        %p231 = scmp.lt.s32.totalorder %s26, 1
        %s232 = scalar_select %p231, %s26, 1
        %p233 = scmp.lt.s32.totalorder %s27, 0
        %s234 = scalar_select %p233, %s27, 0
        %s235 = sadd.s32 %s234, %s232
        %s236 = smul.addr %s235, 4
        %s237 = scalar_lea.vmem %s0, %s236
        %p238 = pneg %p63
        %p239 = pneg %p60
        %s240 = sand.u32 %s78, 1
        %s241 = scalar_lea.sflag [#allocation7], %s240
        %s242 = sand.u32 %s78, 1
        %s243 = smul.addr %s242, 4
        %s244 = scalar_lea.vmem [#allocation6], %s243
        %p245 = pneg %p91
        %p246 = pneg %p88
        %p247 = pneg %p112
        %p248 = pneg %p109
        %p249 = pneg %p133
        %p250 = pneg %p130
        %p251 = pneg %p161
        %p252 = pneg %p158
        %s253 = sand.u32 %s148, 1
        %s254 = scalar_lea.sflag [#allocation8], %s253
        %s255 = sand.u32 %s148, 1
        %s256 = smul.addr %s255, 8
        %s257 = scalar_lea.vmem [#allocation9], %s256
        %p258 = scmp.lt.s32.totalorder %s26, 1
        %s259 = scalar_select %p258, %s26, 1
        %p260 = scmp.lt.s32.totalorder %s27, 0
        %s261 = scalar_select %p260, %s27, 0
        %s262 = sadd.s32 %s261, %s259
        %s263 = smul.addr %s262, 4
        %s264 = scalar_lea.vmem %s0, %s263
        %s266 = smul.u32 %s27, 8
        %s267 = smul.u32 %s28, 8
        %p268 = scmp.eq.s32.totalorder %s28, 0
        // Predicated region
        $region41: #{tpu_custom_call.1} parent=35 // pred_check
          %p269 = pneg %p268
        $region42: #{tpu_custom_call.1} parent=35 // pred_check_branch
          %271 = sbr.rel (%p269) target = $region44
        $region43: #{tpu_custom_call.1} parent=35 // pred_region
          %v272 = vld [vmem:[%s264] sm:$0xf]
          %v273 = vld [vmem:[%s2] sm:$0xf]
          %v274 = vld [vmem:[%s2 + $0x4] sm:$0xf]
          %v275 = vld [vmem:[%s2 + $0x8] sm:$0xf]
          %v276 = vld [vmem:[%s2 + $0xc] sm:$0xf]
          %v281 = vunpack.c.l.b16 %v273
          %v282 = vunpack.c.l.b16 %v274
          %v283 = vunpack.c.l.b16 %v275
          %v284 = vunpack.c.l.b16 %v276
          %v285 = vpack.c.b16 %v282, %v281
          %v286 = vpack.c.b16 %v284, %v283
          %vm289 = vcmask 261120
          %v291 = vsel %vm289, %v272, 0
          %293 = vmatprep.subr.bf16.mxu0 0
          %294 = vmatpush1.bf16.msra.mxu0 %v285
          %295 = vmatprep.subr.bf16.mxu0 0
          %296 = vmatpush1.bf16.msra.mxu0 %v286
          %297 = vmatprep.subr.bf16.mxu0 0
          %298 = vmatpush1.bf16.msra.mxu0 0
          %299 = vmatprep.subr.bf16.mxu0 0
          %300 = vmatpush1.bf16.msra.mxu0 0
          %301 = vmatprep.subr.bf16.mxu0 0
          %302 = vmatpush1.bf16.msra.mxu0 0
          %303 = vmatprep.subr.bf16.mxu0 0
          %304 = vmatpush1.bf16.msra.mxu0 0
          %305 = vmatprep.subr.bf16.mxu0 0
          %306 = vmatpush1.bf16.msra.mxu0 0
          %307 = vmatprep.subr.bf16.mxu0 0
          %308 = vmatpush1.bf16.msra.mxu0 0
          %309 = vmatprep.subr.bf16.mxu0 0
          %310 = vmatpush1.bf16.msra.mxu0 0
          %311 = vmatprep.subr.bf16.mxu0 0
          %312 = vmatpush1.bf16.msra.mxu0 0
          %313 = vmatprep.subr.bf16.mxu0 0
          %314 = vmatpush1.bf16.msra.mxu0 0
          %315 = vmatprep.subr.bf16.mxu0 0
          %316 = vmatpush1.bf16.msra.mxu0 0
          %317 = vmatprep.subr.bf16.mxu0 0
          %318 = vmatpush1.bf16.msra.mxu0 0
          %319 = vmatprep.subr.bf16.mxu0 0
          %320 = vmatpush1.bf16.msra.mxu0 0
          %321 = vmatprep.subr.bf16.mxu0 0
          %322 = vmatpush1.bf16.msra.mxu0 0
          %323 = vmatprep.subr.bf16.mxu0 0
          %324 = vmatpush1.bf16.msra.mxu0 0
          %325 = vmatprep.mubr.bf16.mxu0 0
          %326 = vmatmul.mubr.bf16.gmra.mrb[0].mxu0 %v291
          %v327 = vpop.f32.mrb[0].mxu0
          %v328 = vadd.f32 0.0, %v327
          %v329 = vpop.f32.mrb[0].mxu0
          %v330 = vpop.f32.mrb[0].mxu0
          %v331 = vpop.f32.mrb[0].mxu0
          %332 = vdwg.mxu0
          %v333 = vmul.f32 %v328, 0.17677669
          %vm334 = vcmask 130048
          %335 = vst.msk [vmem:[#allocation2] sm:$0xff] %vm334, %v333
          %vm336 = vcmask 7168
          %337 = vst.msk [vmem:[#allocation3] sm:$0xff] %vm336, -inf
          %338 = vst.msk [vmem:[#allocation4] sm:$0xff] %vm336, 0.0
          %339 = vst.msk [vmem:[#allocation5] sm:$0xff] %vm334, 0.0
        $region44: #{tpu_custom_call.1} parent=35 // pred_fallthru
          _
        %s340 = sadd.s32 %s266, 7
        %p341 = scmp.le.s32.totalorder %s267, %s340
        // Predicated region
        $region45: #{tpu_custom_call.1} parent=35 // pred_check
          %p342 = pneg %p341
        $region46: #{tpu_custom_call.1} parent=35 // pred_check_branch
          %344 = sbr.rel (%p342) target = $region48
        $region47: #{tpu_custom_call.1} parent=35 // pred_region
          %v345 = vld [vmem:[%s226] sm:$0xf]
          %v346 = vld [vmem:[%s3] sm:$0xf]
          %v347 = vld [vmem:[%s3 + $0x4] sm:$0xf]
          %v348 = vld [vmem:[%s3 + $0x8] sm:$0xf]
          %v349 = vld [vmem:[%s3 + $0xc] sm:$0xf]
          %v354 = vunpack.c.l.b16 %v346
          %v355 = vunpack.c.l.b16 %v347
          %v356 = vunpack.c.l.b16 %v348
          %v357 = vunpack.c.l.b16 %v349
          %v358 = vpack.c.b16 %v355, %v354
          %v359 = vpack.c.b16 %v357, %v356
          %vm362 = vcmask 261120
          %v364 = vsel %vm362, %v345, 0
          %366 = vmatprep.subr.bf16.mxu0 0
          %367 = vmatpush1.bf16.msra.mxu0 %v358
          %368 = vmatprep.subr.bf16.mxu0 0
          %369 = vmatpush1.bf16.msra.mxu0 %v359
          %370 = vmatprep.subr.bf16.mxu0 0
          %371 = vmatpush1.bf16.msra.mxu0 0
          %372 = vmatprep.subr.bf16.mxu0 0
          %373 = vmatpush1.bf16.msra.mxu0 0
          %374 = vmatprep.subr.bf16.mxu0 0
          %375 = vmatpush1.bf16.msra.mxu0 0
          %376 = vmatprep.subr.bf16.mxu0 0
          %377 = vmatpush1.bf16.msra.mxu0 0
          %378 = vmatprep.subr.bf16.mxu0 0
          %379 = vmatpush1.bf16.msra.mxu0 0
          %380 = vmatprep.subr.bf16.mxu0 0
          %381 = vmatpush1.bf16.msra.mxu0 0
          %382 = vmatprep.subr.bf16.mxu0 0
          %383 = vmatpush1.bf16.msra.mxu0 0
          %384 = vmatprep.subr.bf16.mxu0 0
          %385 = vmatpush1.bf16.msra.mxu0 0
          %386 = vmatprep.subr.bf16.mxu0 0
          %387 = vmatpush1.bf16.msra.mxu0 0
          %388 = vmatprep.subr.bf16.mxu0 0
          %389 = vmatpush1.bf16.msra.mxu0 0
          %390 = vmatprep.subr.bf16.mxu0 0
          %391 = vmatpush1.bf16.msra.mxu0 0
          %392 = vmatprep.subr.bf16.mxu0 0
          %393 = vmatpush1.bf16.msra.mxu0 0
          %394 = vmatprep.subr.bf16.mxu0 0
          %395 = vmatpush1.bf16.msra.mxu0 0
          %396 = vmatprep.subr.bf16.mxu0 0
          %397 = vmatpush1.bf16.msra.mxu0 0
          %398 = vmatprep.mubr.bf16.mxu0 0
          %399 = vmatmul.mubr.bf16.gmra.mrb[0].mxu0 %v364
          %v400 = vpop.f32.mrb[0].mxu0
          %v401 = vadd.f32 0.0, %v400
          %v402 = vpop.f32.mrb[0].mxu0
          %v403 = vpop.f32.mrb[0].mxu0
          %v404 = vpop.f32.mrb[0].mxu0
          %405 = vdwg.mxu0
          %v406 = vpack.c.bf16 %v401, %v401
          %v407 = vld [vmem:[#allocation2] sm:$0xff]
          %v408 = vpack.c.bf16 %v407, %v407
          %vm409 = vcmask 130048
          %v411 = vsel %vm409, %v408, 0
          %v414 = vsel %vm409, %v406, 0
          %416 = vmatprep.subr.bf16.mxu0 0
          %417 = vmatpush1.bf16.xpose.msra.mxu0 %v414
          %418 = vmatprep.subr.bf16.mxu0 0
          %419 = vmatpush1.bf16.xpose.msra.mxu0 0
          %420 = vmatprep.subr.bf16.mxu0 0
          %421 = vmatpush1.bf16.xpose.msra.mxu0 0
          %422 = vmatprep.subr.bf16.mxu0 0
          %423 = vmatpush1.bf16.xpose.msra.mxu0 0
          %424 = vmatprep.subr.bf16.mxu0 0
          %425 = vmatpush1.bf16.xpose.msra.mxu0 0
          %426 = vmatprep.subr.bf16.mxu0 0
          %427 = vmatpush1.bf16.xpose.msra.mxu0 0
          %428 = vmatprep.subr.bf16.mxu0 0
          %429 = vmatpush1.bf16.xpose.msra.mxu0 0
          %430 = vmatprep.subr.bf16.mxu0 0
          %431 = vmatpush1.bf16.xpose.msra.mxu0 0
          %432 = vmatprep.subr.bf16.mxu0 0
          %433 = vmatpush1.bf16.xpose.msra.mxu0 0
          %434 = vmatprep.subr.bf16.mxu0 0
          %435 = vmatpush1.bf16.xpose.msra.mxu0 0
          %436 = vmatprep.subr.bf16.mxu0 0
          %437 = vmatpush1.bf16.xpose.msra.mxu0 0
          %438 = vmatprep.subr.bf16.mxu0 0
          %439 = vmatpush1.bf16.xpose.msra.mxu0 0
          %440 = vmatprep.subr.bf16.mxu0 0
          %441 = vmatpush1.bf16.xpose.msra.mxu0 0
          %442 = vmatprep.subr.bf16.mxu0 0
          %443 = vmatpush1.bf16.xpose.msra.mxu0 0
          %444 = vmatprep.subr.bf16.mxu0 0
          %445 = vmatpush1.bf16.xpose.msra.mxu0 0
          %446 = vmatprep.subr.bf16.mxu0 0
          %447 = vmatpush1.bf16.xpose.msra.mxu0 0
          %448 = vmatprep.mubr.bf16.mxu0 0
          %449 = vmatmul.mubr.bf16.gmra.mrb[0].mxu0 %v411
          %v450 = vpop.f32.mrb[0].mxu0
          %v451 = vadd.f32 0.0, %v450
          %v452 = vpop.f32.mrb[0].mxu0
          %v453 = vpop.f32.mrb[0].mxu0
          %v454 = vpop.f32.mrb[0].mxu0
          %455 = vdwg.mxu0
          %v456 = vlaneseq
          %v457 = vshrl.u32 %v456, 7
          %v458 = vstv %s266
          %v459 = vadd.s32 %v458, %v457
          %v460 = vlaneseq
          %v461 = vand.u32 %v460, 127
          %v462 = vstv %s267
          %v463 = vadd.s32 %v462, %v461
          %vm464 = vcmp.le.s32.totalorder %v463, %v459
          %v465 = vsel %vm464, %v451, -2.3819763e+38
          %v466 = vld [vmem:[#allocation3] sm:$0xff]
          %vm467 = vcmask 64512
          %v468 = vsel %vm467, %v465, -inf
          %469 = vmax.xlane.f32.xlu0 %v468
          %v470 = vpop.xlane.xlu0 %469
          %v471 = vmax.f32 %v466, %v470
          %v472 = vsub.f32 %v466, %v471
          %v473 = vmul.f32 %v472, 1.442695
          %v474 = vpow.pop %v473
          %476 = vset.pattern.permute.xlu0 0
          %477 = vperm.xlu0 %476, %v471
          %v478 = vpop.permute.xlu0 %477
          %v480 = vsub.f32 %v465, %v478
          %v481 = vmul.f32 %v480, 1.442695
          %v482 = vpow.pop %v481
          %v483 = vld [vmem:[#allocation4] sm:$0xff]
          %v484 = vmul.f32 %v474, %v483
          %v485 = vsel %vm467, %v482, 0.0
          %486 = vadd.xlane.f32.xlu0 %v485
          %v487 = vpop.xlane.xlu0 %486
          %v488 = vadd.f32 %v484, %v487
          %vm489 = vcmask 7168
          %490 = vst.msk [vmem:[#allocation4] sm:$0xff] %vm489, %v488
          %v491 = vld [vmem:[#allocation5] sm:$0xff]
          %493 = vset.pattern.permute.xlu0 0
          %494 = vperm.xlu0 %493, %v474
          %v495 = vpop.permute.xlu0 %494
          %v497 = vmul.f32 %v495, %v491
          %v498 = vpack.c.bf16 %v482, %v482
          %500 = vrot.lane.b32.xlu0 %v406, 112
          %v501 = vpop.permute.xlu0 %500
          %v503 = vsel %vm467, %v498, 0
          %vm505 = vcmask 1043456
          %v507 = vsel %vm505, %v501, 0
          %509 = vmatprep.subr.bf16.mxu0 0
          %510 = vmatpush1.bf16.msra.mxu0 %v507
          %511 = vmatprep.subr.bf16.mxu0 0
          %512 = vmatpush1.bf16.msra.mxu0 0
          %513 = vmatprep.subr.bf16.mxu0 0
          %514 = vmatpush1.bf16.msra.mxu0 0
          %515 = vmatprep.subr.bf16.mxu0 0
          %516 = vmatpush1.bf16.msra.mxu0 0
          %517 = vmatprep.subr.bf16.mxu0 0
          %518 = vmatpush1.bf16.msra.mxu0 0
          %519 = vmatprep.subr.bf16.mxu0 0
          %520 = vmatpush1.bf16.msra.mxu0 0
          %521 = vmatprep.subr.bf16.mxu0 0
          %522 = vmatpush1.bf16.msra.mxu0 0
          %523 = vmatprep.subr.bf16.mxu0 0
          %524 = vmatpush1.bf16.msra.mxu0 0
          %525 = vmatprep.subr.bf16.mxu0 0
          %526 = vmatpush1.bf16.msra.mxu0 0
          %527 = vmatprep.subr.bf16.mxu0 0
          %528 = vmatpush1.bf16.msra.mxu0 0
          %529 = vmatprep.subr.bf16.mxu0 0
          %530 = vmatpush1.bf16.msra.mxu0 0
          %531 = vmatprep.subr.bf16.mxu0 0
          %532 = vmatpush1.bf16.msra.mxu0 0
          %533 = vmatprep.subr.bf16.mxu0 0
          %534 = vmatpush1.bf16.msra.mxu0 0
          %535 = vmatprep.subr.bf16.mxu0 0
          %536 = vmatpush1.bf16.msra.mxu0 0
          %537 = vmatprep.subr.bf16.mxu0 0
          %538 = vmatpush1.bf16.msra.mxu0 0
          %539 = vmatprep.subr.bf16.mxu0 0
          %540 = vmatpush1.bf16.msra.mxu0 0
          %541 = vmatprep.mubr.bf16.mxu0 0
          %542 = vmatmul.mubr.bf16.gmra.mrb[0].mxu0 %v503
          %v543 = vpop.f32.mrb[0].mxu0
          %v544 = vadd.f32 0.0, %v543
          %v545 = vpop.f32.mrb[0].mxu0
          %v546 = vpop.f32.mrb[0].mxu0
          %v547 = vpop.f32.mrb[0].mxu0
          %548 = vdwg.mxu0
          %v549 = vadd.f32 %v497, %v544
          %550 = vst.msk [vmem:[#allocation5] sm:$0xff] %vm409, %v549
          %551 = vst.msk [vmem:[#allocation3] sm:$0xff] %vm489, %v471
        $region48: #{tpu_custom_call.1} parent=35 // pred_fallthru
          _
        // Predicated region
        $region49: #{tpu_custom_call.1} parent=35 // pred_check
          %p552 = pneg %p268
        $region50: #{tpu_custom_call.1} parent=35 // pred_check_branch
          %554 = sbr.rel (%p552) target = $region52
        $region51: #{tpu_custom_call.1} parent=35 // pred_region
          %v555 = vld [vmem:[#allocation4] sm:$0xff]
          %v556 = vrcp.pop %v555
          %v557 = vld [vmem:[#allocation5] sm:$0xff]
          %559 = vset.pattern.permute.xlu0 0
          %560 = vperm.xlu0 %559, %v556
          %v561 = vpop.permute.xlu0 %560
          %v563 = vmul.f32 %v557, %v561
          %vm564 = vcmask 130048
          %565 = vst.msk [vmem:[%s257] sm:$0xff] %vm564, %v563
        $region52: #{tpu_custom_call.1} parent=35 // pred_fallthru
          _
        %s566 = sand.u32 %s148, 1
        %s567 = scalar_lea.sflag [#allocation8], %s566
        %s568 = sand.u32 %s148, 1
        %s569 = smul.addr %s568, 8
        %s570 = scalar_lea.vmem [#allocation9], %s569
        // Predicated region
        $region53: #{tpu_custom_call.1} parent=35 // pred_check
          %p571 = pneg %p158
        $region54: #{tpu_custom_call.1} parent=35 // pred_check_branch
          %573 = sbr.rel (%p571) target = $region56
        $region55: #{tpu_custom_call.1} parent=35 // pred_region
          %s575 = ssub.s32 128, 128
          %576 = vsyncadd %s567, %s575
          %s577 = sadd.s32 %s27, %s26
          %s578 = smul.addr %s577, 128
          %s579 = scalar_lea.hbm %s4, %s578
          %s581 = sshll.u32 %s570, 4
          %s582 = int_to_ptr.vmem [resolvable:$true] %s581
          %584 = dma.vmem_to_hbm [thread:$0]  %s582, 128, %s579, %s567
        $region56: #{tpu_custom_call.1} parent=35 // pred_fallthru
          _
      $region36: #{tpu_custom_call.1} parent=5 // pred_fallthru
        _
      %p585 = scmp.le.s32.totalorder 2, %s16
      // Predicated region
      $region57: #{tpu_custom_call.1} parent=5 // pred_check
        %p586 = pneg %p585
      $region58: #{tpu_custom_call.1} parent=5 // pred_check_branch
        %588 = sbr.rel (%p586) target = $region60
      $region59: #{tpu_custom_call.1} parent=5 // pred_region
        %s589 = ssub.s32 %s16, 2
        // Predicated region
        $region61: #{tpu_custom_call.1} parent=59 // pred_check
          %p590 = pneg %p164
        $region62: #{tpu_custom_call.1} parent=59 // pred_check_branch
          %592 = sbr.rel (%p590) target = $region64
        $region63: #{tpu_custom_call.1} parent=59 // pred_region
          %s593 = sand.u32 %s149, 1
          %s594 = scalar_lea.sflag [#allocation8], %s593
          %s595 = sand.u32 %s149, 1
          %s596 = smul.addr %s595, 8
          %s597 = scalar_lea.vmem [#allocation9], %s596
          %598 = dma.done %s594, 128
        $region64: #{tpu_custom_call.1} parent=59 // pred_fallthru
          _
      $region60: #{tpu_custom_call.1} parent=5 // pred_fallthru
        _
    $region6: #{tpu_custom_call.1} parent=1 // loop_footer
      %s20 = sadd.s32 1, %s16
    $region7: #{tpu_custom_call.1} parent=1 // loop_footer_branch
      %15 = sbr.rel target = $region3
    $region8: #{tpu_custom_call.1} parent=1 // loop_exit
      _
    %599 = vsyncpa [#allocation7], 1
    %s600 = scalar_lea.sflag [#allocation7], 1
    %601 = vsyncpa %s600, 1
    %602 = vsyncpa [#allocation8], 1
    %s603 = scalar_lea.sflag [#allocation8], 1
    %604 = vsyncpa %s603, 1

</llo_original>
